<compile_context>
chip_gen: v7x
topology: tpu7x:2x2x1
jax: 0.10.0
libtpu: 0.0.40
codegen_flags: <defaults>
</compile_context>

<pallas_src>
import jax
import jax.numpy as jnp
from jax.experimental import pallas as pl
from jax.experimental.pallas import tpu as pltpu

N_STATES = 17   # e.g. HalfCheetah observation dim
N_ACTIONS = 6   # e.g. HalfCheetah action dim
HIDDEN = 256


def qnet_kernel(x_ref, w1_ref, b1_ref, w2_ref, b2_ref, w3_ref, b3_ref, o_ref):
    # Layer 1 (merged, K = N_STATES + N_ACTIONS):
    #   h1^T = relu(W1 @ x^T + b1)                    -> (256, TB)
    z1 = jnp.dot(w1_ref[...], x_ref[...], preferred_element_type=jnp.float32)
    h1 = jnp.maximum(z1 + b1_ref[...], 0.0).astype(jnp.bfloat16)

    # Layer 2: h2^T = relu(W2 @ h1^T + b2)            -> (256, TB)
    z2 = jnp.dot(w2_ref[...], h1, preferred_element_type=jnp.float32)
    h2 = jnp.maximum(z2 + b2_ref[...], 0.0).astype(jnp.bfloat16)

    # Head (256 -> 1): VPU broadcast-multiply + sublane reduction.  Because
    # the batch lives on the lane axis, the result (1, TB) is already
    # lane-dense: unmasked vst stores, compact output tile, no relayout,
    # and no N=1 MXU matmul wasting 127/128 output lanes.
    q = jnp.sum(h2 * w3_ref[...], axis=0, keepdims=True) + b3_ref[0]
    o_ref[0] = q.astype(o_ref.dtype)                  # (1, TB)


def _round_up(x: int, m: int) -> int:
    return ((x + m - 1) // m) * m


def qnet_forward(x1, x2, kernel_params, *, block_batch=2048):
    """x1: (B, N_STATES) f32, x2: (B, N_ACTIONS) f32  ->  (B, 1) f32."""
    w1, b1, w2, b2, w3, b3 = kernel_params
    B = x1.shape[0]
    d_in = x1.shape[1] + x2.shape[1]
    hidden = w1.shape[0]

    # Batch tile: lane-aligned (multiple of 128) whenever we tile, so the
    # feature-major input block and lane-dense output block stay compliant
    # with TPU (8,128) tiling; aim for >=2 tiles so both v7x TensorCores get
    # work on the "parallel" grid axis.  Tiny batches use one exact tile.
    cap = max(128, (block_batch // 128) * 128)
    tb = min(cap, _round_up(pl.cdiv(B, 2), 128))
    if tb >= B:
        tb = _round_up(B, 8)
    num_tiles = pl.cdiv(B, tb)
    b_pad = num_tiles * tb

    # Pack the kernel input once (outside the kernel, trivially cheap):
    #   concat  -> single merged K=23 layer-1 matmul (no split W1 slabs),
    #   bf16    -> half the input HBM/DMA bytes,
    #   pad+T   -> feature-major (d_in, B_pad) so the batch is the lane axis.
    x = jnp.concatenate([x1, x2], axis=1).astype(jnp.bfloat16)
    if b_pad != B:
        x = jnp.pad(x, ((0, b_pad - B), (0, 0)))      # zero rows, sliced off below
    xt = x.T                                          # (d_in, b_pad) bf16

    resident = lambda shape: pl.BlockSpec(shape, lambda i: (0, 0))

    flops = 2 * b_pad * (d_in * hidden + hidden * hidden + hidden)
    bytes_accessed = (xt.size * 2 + b_pad * 4
                      + (w1.size + w2.size) * 2
                      + (b1.size + b2.size + w3.size + b3.size) * 4)

    out = pl.pallas_call(
        qnet_kernel,
        out_shape=jax.ShapeDtypeStruct((num_tiles, 1, tb), jnp.float32),
        grid=(num_tiles,),
        in_specs=[
            pl.BlockSpec((d_in, tb), lambda i: (0, i)),        # x^T (batch-tiled)
            resident((hidden, d_in)),                          # W1   bf16, resident
            resident((hidden, 1)),                             # b1   f32 column
            resident((hidden, hidden)),                        # W2   bf16, resident
            resident((hidden, 1)),                             # b2   f32 column
            resident((hidden, 1)),                             # W3   f32 column (head)
            pl.BlockSpec(memory_space=pltpu.MemorySpace.SMEM), # b3   scalar in SMEM
        ],
        out_specs=pl.BlockSpec((1, 1, tb), lambda i: (i, 0, 0)),
        compiler_params=pltpu.CompilerParams(
            dimension_semantics=("parallel",),
            vmem_limit_bytes=32 * 1024 * 1024),
        cost_estimate=pl.CostEstimate(
            flops=flops, transcendentals=0, bytes_accessed=bytes_accessed),
    )(xt, w1, b1, w2, b2, w3, b3)

    # (num_tiles, 1, tb) -> (b_pad,) -> (B, 1); padded rows are dropped.
    return out.reshape(b_pad)[:B].reshape(B, 1)


def init_params(key):
    """Deterministic init matching the PyTorch module.

    nn.Linear weights are (out_features, in_features) with the module's
    normal(0, 1e-5) override; biases keep PyTorch's default
    uniform(-1/sqrt(fan_in), 1/sqrt(fan_in)).  All float32.
    """
    d_in = N_STATES + N_ACTIONS
    ks = jax.random.split(key, 6)

    def linear(kw, kb, fan_in, fan_out):
        w = jax.random.normal(kw, (fan_out, fan_in), jnp.float32) * 1e-5
        bound = fan_in ** -0.5
        b = jax.random.uniform(kb, (fan_out,), jnp.float32, -bound, bound)
        return w, b

    w1, b1 = linear(ks[0], ks[1], d_in, HIDDEN)
    w2, b2 = linear(ks[2], ks[3], HIDDEN, HIDDEN)
    w3, b3 = linear(ks[4], ks[5], HIDDEN, 1)
    return (w1, b1, w2, b2, w3, b3)


def prepare_params(params):
    """One-time repack outside the hot path (feature-major kernel layout):
    W1/W2 cast to bf16 (native MXU dtype, f32 accumulate in-kernel);
    b1/b2/W3 become (256, 1) f32 columns that broadcast over the lane
    (batch) axis; b3 becomes a 1-element f32 SMEM scalar."""
    w1, b1, w2, b2, w3, b3 = params
    return (w1.astype(jnp.bfloat16),        # (256, d_in)
            b1.reshape(-1, 1),              # (256, 1) f32
            w2.astype(jnp.bfloat16),        # (256, 256)
            b2.reshape(-1, 1),              # (256, 1) f32
            w3.reshape(-1, 1),              # (256, 1) f32 head column
            b3.reshape(1))                  # (1,)     f32 SMEM scalar


def qnet_ref(x1, x2, params):
    # Pure-JAX f32 reference (PyTorch-layout weights) for correctness checks.
    w1, b1, w2, b2, w3, b3 = params
    x = jnp.concatenate([x1, x2], axis=1)
    h1 = jnp.maximum(x @ w1.T + b1, 0.0)
    h2 = jnp.maximum(h1 @ w2.T + b2, 0.0)
    return h2 @ w3.T + b3


if __name__ == "__main__":
    key = jax.random.PRNGKey(0)
    k_params, k_x1, k_x2 = jax.random.split(key, 3)

    params = init_params(k_params)
    kparams = prepare_params(params)

    # Small batch: single exact tile, grid=(1,).
    B = 8
    x1 = jax.random.normal(k_x1, (B, N_STATES), jnp.float32)   # state
    x2 = jax.random.normal(k_x2, (B, N_ACTIONS), jnp.float32)  # action
    out = jax.block_until_ready(qnet_forward(x1, x2, kparams))
    ref = qnet_ref(x1, x2, params)
    assert out.shape == (B, 1), out.shape
    # bf16 terms only touch the 1e-5-scale weight products, so the error is
    # ~1e-6 absolute; keep a tight, atol-dominant check.
    assert jnp.allclose(out, ref, atol=1e-4, rtol=1e-3), \
        "mismatch vs reference (single tile)"

    # Ragged multi-tile batch: B=200 with 128-row tiles -> grid=(2,), second
    # tile zero-padded; padded rows are sliced off in the wrapper.
    B2 = 200
    x1l = jax.random.normal(k_x1, (B2, N_STATES), jnp.float32)
    x2l = jax.random.normal(k_x2, (B2, N_ACTIONS), jnp.float32)
    outl = jax.block_until_ready(
        qnet_forward(x1l, x2l, kparams, block_batch=128))
    refl = qnet_ref(x1l, x2l, params)
    assert outl.shape == (B2, 1), outl.shape
    assert jnp.allclose(outl, refl, atol=1e-4, rtol=1e-3), \
        "mismatch vs reference (tiled/ragged)"

    print("KERNEL_OK")
</pallas_src>

<mosaic_0001>
module attributes {stable_mosaic.version = 11 : i64} {
  func.func @qnet_kernel(%arg0: i32, %arg1: memref<23x8xbf16, #tpu.memory_space<vmem>>, %arg2: memref<256x23xbf16, #tpu.memory_space<vmem>>, %arg3: memref<256x1xf32, #tpu.memory_space<vmem>>, %arg4: memref<256x256xbf16, #tpu.memory_space<vmem>>, %arg5: memref<256x1xf32, #tpu.memory_space<vmem>>, %arg6: memref<256x1xf32, #tpu.memory_space<vmem>>, %arg7: memref<1xf32, #tpu.memory_space<smem>>, %arg8: memref<1x1x8xf32, #tpu.memory_space<vmem>>) attributes {dimension_semantics = [#tpu.dimension_semantics<parallel>], iteration_bounds = array<i64: 1>, scalar_prefetch = 0 : i64, scratch_operands = 0 : i64, tpu.core_type = #tpu.core_type<tc>, window_params = [{transform_indices = @transform_0, window_bounds = array<i64: 23, 8>}, {pipeline_mode = #tpu.pipeline_mode<synchronous>, transform_indices = @transform_1, window_bounds = array<i64: 256, 23>}, {pipeline_mode = #tpu.pipeline_mode<synchronous>, transform_indices = @transform_2, window_bounds = array<i64: 256, 1>}, {pipeline_mode = #tpu.pipeline_mode<synchronous>, transform_indices = @transform_3, window_bounds = array<i64: 256, 256>}, {pipeline_mode = #tpu.pipeline_mode<synchronous>, transform_indices = @transform_4, window_bounds = array<i64: 256, 1>}, {pipeline_mode = #tpu.pipeline_mode<synchronous>, transform_indices = @transform_5, window_bounds = array<i64: 256, 1>}, {transform_indices = @transform_6, window_bounds = array<i64: 1>}, {transform_indices = @transform_7, window_bounds = array<i64: 1, 1, 8>}]} {
    %c0 = arith.constant 0 : index
    %c0_0 = arith.constant 0 : index
    %0 = vector.load %arg2[%c0, %c0_0] : memref<256x23xbf16, #tpu.memory_space<vmem>>, vector<256x23xbf16>
    %c0_1 = arith.constant 0 : index
    %c0_2 = arith.constant 0 : index
    %1 = vector.load %arg1[%c0_1, %c0_2] : memref<23x8xbf16, #tpu.memory_space<vmem>>, vector<23x8xbf16>
    %cst = arith.constant dense<0.000000e+00> : vector<256x8xf32>
    %2 = tpu.matmul %0, %1, %cst {dimension_numbers = #tpu.dot_dimension_numbers<[1], [0], [0], [1], [0, 0, 1, 1], [], []>} : vector<256x23xbf16>, vector<23x8xbf16>, vector<256x8xf32> -> vector<256x8xf32>
    %c0_3 = arith.constant 0 : index
    %c0_4 = arith.constant 0 : index
    %3 = vector.load %arg3[%c0_3, %c0_4] : memref<256x1xf32, #tpu.memory_space<vmem>>, vector<256x1xf32>
    %4 = vector.broadcast %3 : vector<256x1xf32> to vector<256x8xf32>
    %5 = arith.addf %2, %4 : vector<256x8xf32>
    %cst_5 = arith.constant 0.000000e+00 : f32
    %6 = vector.broadcast %cst_5 : f32 to vector<256x8xf32>
    %7 = arith.maximumf %5, %6 : vector<256x8xf32>
    %8 = arith.truncf %7 : vector<256x8xf32> to vector<256x8xbf16>
    %c0_6 = arith.constant 0 : index
    %c0_7 = arith.constant 0 : index
    %9 = vector.load %arg4[%c0_6, %c0_7] : memref<256x256xbf16, #tpu.memory_space<vmem>>, vector<256x256xbf16>
    %cst_8 = arith.constant dense<0.000000e+00> : vector<256x8xf32>
    %10 = tpu.matmul %9, %8, %cst_8 {dimension_numbers = #tpu.dot_dimension_numbers<[1], [0], [0], [1], [0, 0, 1, 1], [], []>} : vector<256x256xbf16>, vector<256x8xbf16>, vector<256x8xf32> -> vector<256x8xf32>
    %c0_9 = arith.constant 0 : index
    %c0_10 = arith.constant 0 : index
    %11 = vector.load %arg5[%c0_9, %c0_10] : memref<256x1xf32, #tpu.memory_space<vmem>>, vector<256x1xf32>
    %12 = vector.broadcast %11 : vector<256x1xf32> to vector<256x8xf32>
    %13 = arith.addf %10, %12 : vector<256x8xf32>
    %cst_11 = arith.constant 0.000000e+00 : f32
    %14 = vector.broadcast %cst_11 : f32 to vector<256x8xf32>
    %15 = arith.maximumf %13, %14 : vector<256x8xf32>
    %16 = arith.truncf %15 : vector<256x8xf32> to vector<256x8xbf16>
    %c0_12 = arith.constant 0 : index
    %c0_13 = arith.constant 0 : index
    %17 = vector.load %arg6[%c0_12, %c0_13] : memref<256x1xf32, #tpu.memory_space<vmem>>, vector<256x1xf32>
    %18 = arith.extf %16 : vector<256x8xbf16> to vector<256x8xf32>
    %19 = vector.broadcast %17 : vector<256x1xf32> to vector<256x8xf32>
    %20 = arith.mulf %18, %19 : vector<256x8xf32>
    %cst_14 = arith.constant dense<0.000000e+00> : vector<8xf32>
    %21 = vector.multi_reduction <add>, %20, %cst_14 [0] : vector<256x8xf32> to vector<8xf32>
    %22 = vector.shape_cast %21 : vector<8xf32> to vector<1x8xf32>
    %c0_15 = arith.constant 0 : index
    %23 = memref.load %arg7[%c0_15] : memref<1xf32, #tpu.memory_space<smem>>
    %24 = vector.broadcast %23 : f32 to vector<1x8xf32>
    %25 = arith.addf %22, %24 : vector<1x8xf32>
    %c0_16 = arith.constant 0 : index
    %c0_17 = arith.constant 0 : index
    %c0_18 = arith.constant 0 : index
    %26 = vector.load %arg8[%c0_16, %c0_17, %c0_18] : memref<1x1x8xf32, #tpu.memory_space<vmem>>, vector<1x1x8xf32>
    %27 = vector.shape_cast %26 : vector<1x1x8xf32> to vector<1x8xf32>
    %28 = vector.shape_cast %25 : vector<1x8xf32> to vector<1x1x8xf32>
    tpu.vector_store %arg8[%c0_16, %c0_17, %c0_18], %28 {strides = array<i32>} : memref<1x1x8xf32, #tpu.memory_space<vmem>>, vector<1x1x8xf32>,
    return
  }
  func.func @transform_0(%arg0: i32) -> (i32, i32) {
    %c0_i32 = arith.constant 0 : i32
    %c0_i32_0 = arith.constant 0 : i32
    return %c0_i32, %arg0 : i32, i32
  }
  func.func @transform_1(%arg0: i32) -> (i32, i32) {
    %c0_i32 = arith.constant 0 : i32
    %c0_i32_0 = arith.constant 0 : i32
    %c0_i32_1 = arith.constant 0 : i32
    return %c0_i32, %c0_i32_0 : i32, i32
  }
  func.func @transform_2(%arg0: i32) -> (i32, i32) {
    %c0_i32 = arith.constant 0 : i32
    %c0_i32_0 = arith.constant 0 : i32
    %c0_i32_1 = arith.constant 0 : i32
    return %c0_i32, %c0_i32_0 : i32, i32
  }
  func.func @transform_3(%arg0: i32) -> (i32, i32) {
    %c0_i32 = arith.constant 0 : i32
    %c0_i32_0 = arith.constant 0 : i32
    %c0_i32_1 = arith.constant 0 : i32
    return %c0_i32, %c0_i32_0 : i32, i32
  }
  func.func @transform_4(%arg0: i32) -> (i32, i32) {
    %c0_i32 = arith.constant 0 : i32
    %c0_i32_0 = arith.constant 0 : i32
    %c0_i32_1 = arith.constant 0 : i32
    return %c0_i32, %c0_i32_0 : i32, i32
  }
  func.func @transform_5(%arg0: i32) -> (i32, i32) {
    %c0_i32 = arith.constant 0 : i32
    %c0_i32_0 = arith.constant 0 : i32
    %c0_i32_1 = arith.constant 0 : i32
    return %c0_i32, %c0_i32_0 : i32, i32
  }
  func.func @transform_6(%arg0: i32) -> i32 {
    %c0_i32 = arith.constant 0 : i32
    %c0_i32_0 = arith.constant 0 : i32
    return %c0_i32 : i32
  }
  func.func @transform_7(%arg0: i32) -> (i32, i32, i32) {
    %c0_i32 = arith.constant 0 : i32
    %c0_i32_0 = arith.constant 0 : i32
    %c0_i32_1 = arith.constant 0 : i32
    return %arg0, %c0_i32, %c0_i32_0 : i32, i32, i32
  }
}

</mosaic_0001>

<llo_original>
// kernel: tpu_custom_call.1
$region0: #{tpu_custom_call.1}
  #allocation0 [shape = 'u32[]', space=smem, size = 0x4, offset = 0x4, fixed_abs, tag = 'smem constant byte address 0x4 - core index']
  #allocation1 [shape = 'u32[144,128]{1,0:T(1,128)}', space=vmem, size = 0x12000, scoped, tag = 'internal scratch']
  #allocation2 [shape = 'f32[1]{0:T(128)S(6)}', space=smem, size = 0x200, scoped, tag = 'scoped memory for tpu_custom_call.1']
  %s0 = inlined_call_operand.vmem [shape: bf16[23,8], index: 0, kind: input, shape index: {}]
  %s1 = inlined_call_operand.vmem [shape: bf16[256,23], index: 1, kind: input, shape index: {}]
  %s2 = inlined_call_operand.vmem [shape: f32[256,1], index: 2, kind: input, shape index: {}]
  %s3 = inlined_call_operand.vmem [shape: bf16[256,256], index: 3, kind: input, shape index: {}]
  %s4 = inlined_call_operand.vmem [shape: f32[256,1], index: 4, kind: input, shape index: {}]
  %s5 = inlined_call_operand.vmem [shape: f32[256,1], index: 5, kind: input, shape index: {}]
  %s6 = inlined_call_operand.<no memory space> [shape: f32[1], index: 6, kind: input, shape index: {}]
  %s7 = inlined_call_operand.hbm [shape: f32[1,1,8], index: 7, kind: output, shape index: {}]
  %s8 = sld [smem:[#allocation0]]
  $region38: #{tpu_custom_call.1} parent=0
    _
  %s10 = ssub.s32 1, %s8
  %s11 = scalar_select 0, %s10, %s8
  %12 = sst [smem:[#allocation2]] %s6
  $region1: #{tpu_custom_call.1} parent=0
    #allocation3 [shape = 'u8[512]{0}', space=vmem, size = 0x400, scoped, tag = 'output window, operand 0, single buffered']
    #allocation4 [shape = 's32[1]{0}', space=sflag, size = 0x4, scoped, tag = 'scoped memory for tpu_custom_call.1']
    %13 = vsyncpa [#allocation4], 0
    // Predicated region
    $region2: #{tpu_custom_call.1} parent=1 // pred_check
      _
    $region3: #{tpu_custom_call.1} parent=1 // pred_check_branch
      %15 = sbr.rel (0) target = $region5
    $region4: #{tpu_custom_call.1} parent=1 // pred_region
      _
    $region5: #{tpu_custom_call.1} parent=1 // pred_fallthru
      _
    // Predicated region
    $region6: #{tpu_custom_call.1} parent=1 // pred_check
      _
    $region7: #{tpu_custom_call.1} parent=1 // pred_check_branch
      %17 = sbr.rel (0) target = $region9
    $region8: #{tpu_custom_call.1} parent=1 // pred_region
      _
    $region9: #{tpu_custom_call.1} parent=1 // pred_fallthru
      _
    // Predicated region
    $region10: #{tpu_custom_call.1} parent=1 // pred_check
      _
    $region11: #{tpu_custom_call.1} parent=1 // pred_check_branch
      %19 = sbr.rel (0) target = $region13
    $region12: #{tpu_custom_call.1} parent=1 // pred_region
      _
    $region13: #{tpu_custom_call.1} parent=1 // pred_fallthru
      _
    // Predicated region
    $region14: #{tpu_custom_call.1} parent=1 // pred_check
      _
    $region15: #{tpu_custom_call.1} parent=1 // pred_check_branch
      %21 = sbr.rel (0) target = $region17
    $region16: #{tpu_custom_call.1} parent=1 // pred_region
      _
    $region17: #{tpu_custom_call.1} parent=1 // pred_fallthru
      _
    // Predicated region
    $region18: #{tpu_custom_call.1} parent=1 // pred_check
      _
    $region19: #{tpu_custom_call.1} parent=1 // pred_check_branch
      %23 = sbr.rel (0) target = $region21
    $region20: #{tpu_custom_call.1} parent=1 // pred_region
      _
    $region21: #{tpu_custom_call.1} parent=1 // pred_fallthru
      _
    // Predicated region
    $region22: #{tpu_custom_call.1} parent=1 // pred_check
      _
    $region23: #{tpu_custom_call.1} parent=1 // pred_check_branch
      %25 = sbr.rel (0) target = $region25
    $region24: #{tpu_custom_call.1} parent=1 // pred_region
      _
    $region25: #{tpu_custom_call.1} parent=1 // pred_fallthru
      _
    // Predicated region
    $region26: #{tpu_custom_call.1} parent=1 // pred_check
      _
    $region27: #{tpu_custom_call.1} parent=1 // pred_check_branch
      %27 = sbr.rel (0) target = $region29
    $region28: #{tpu_custom_call.1} parent=1 // pred_region
      _
    $region29: #{tpu_custom_call.1} parent=1 // pred_fallthru
      _
    %v29 = vld [vmem:[%s1] sm:$0xf]
    %v30 = vld [vmem:[%s1 + $0x4] sm:$0xf]
    %v31 = vld [vmem:[%s1 + $0x8] sm:$0xf]
    %v32 = vld [vmem:[%s1 + $0xc] sm:$0xf]
    %v33 = vld [vmem:[%s1 + $0x10] sm:$0xf]
    %v34 = vld [vmem:[%s1 + $0x14] sm:$0xf]
    %v35 = vld [vmem:[%s1 + $0x18] sm:$0xf]
    %v36 = vld [vmem:[%s1 + $0x1c] sm:$0xf]
    %v37 = vld [vmem:[%s1 + $0x20] sm:$0xf]
    %v38 = vld [vmem:[%s1 + $0x24] sm:$0xf]
    %v39 = vld [vmem:[%s1 + $0x28] sm:$0xf]
    %v40 = vld [vmem:[%s1 + $0x2c] sm:$0xf]
    %v41 = vld [vmem:[%s1 + $0x30] sm:$0xf]
    %v42 = vld [vmem:[%s1 + $0x34] sm:$0xf]
    %v43 = vld [vmem:[%s1 + $0x38] sm:$0xf]
    %v44 = vld [vmem:[%s1 + $0x3c] sm:$0xf]
    %v45 = vld [vmem:[%s1 + $0x40] sm:$0xf]
    %v46 = vld [vmem:[%s1 + $0x44] sm:$0xf]
    %v47 = vld [vmem:[%s1 + $0x48] sm:$0xf]
    %v48 = vld [vmem:[%s1 + $0x4c] sm:$0xf]
    %v49 = vld [vmem:[%s1 + $0x50] sm:$0xf]
    %v50 = vld [vmem:[%s1 + $0x54] sm:$0xf]
    %v51 = vld [vmem:[%s1 + $0x58] sm:$0xf]
    %v52 = vld [vmem:[%s1 + $0x5c] sm:$0xf]
    %v53 = vld [vmem:[%s1 + $0x60] sm:$0xf]
    %v54 = vld [vmem:[%s1 + $0x64] sm:$0xf]
    %v55 = vld [vmem:[%s1 + $0x68] sm:$0xf]
    %v56 = vld [vmem:[%s1 + $0x6c] sm:$0xf]
    %v57 = vld [vmem:[%s1 + $0x70] sm:$0xf]
    %v58 = vld [vmem:[%s1 + $0x74] sm:$0xf]
    %v59 = vld [vmem:[%s1 + $0x78] sm:$0xf]
    %v60 = vld [vmem:[%s1 + $0x7c] sm:$0xf]
    %v61 = vld [vmem:[%s0] sm:$0xf]
    %v62 = vld [vmem:[%s0 + $0x4] sm:$0xf]
    %v63 = vld [vmem:[%s0 + $0x8] sm:$0xf]
    %v64 = vld [vmem:[%s2] sm:$0xff]
    %v65 = vld [vmem:[%s2 + $0x8] sm:$0xff]
    %v66 = vld [vmem:[%s2 + $0x10] sm:$0xff]
    %v67 = vld [vmem:[%s2 + $0x18] sm:$0xff]
    %v68 = vld [vmem:[%s2 + $0x20] sm:$0xff]
    %v69 = vld [vmem:[%s2 + $0x28] sm:$0xff]
    %v70 = vld [vmem:[%s2 + $0x30] sm:$0xff]
    %v71 = vld [vmem:[%s2 + $0x38] sm:$0xff]
    %v72 = vld [vmem:[%s2 + $0x40] sm:$0xff]
    %v73 = vld [vmem:[%s2 + $0x48] sm:$0xff]
    %v74 = vld [vmem:[%s2 + $0x50] sm:$0xff]
    %v75 = vld [vmem:[%s2 + $0x58] sm:$0xff]
    %v76 = vld [vmem:[%s2 + $0x60] sm:$0xff]
    %v77 = vld [vmem:[%s2 + $0x68] sm:$0xff]
    %v78 = vld [vmem:[%s2 + $0x70] sm:$0xff]
    %v79 = vld [vmem:[%s2 + $0x78] sm:$0xff]
    %v80 = vld [vmem:[%s2 + $0x80] sm:$0xff]
    %v81 = vld [vmem:[%s2 + $0x88] sm:$0xff]
    %v82 = vld [vmem:[%s2 + $0x90] sm:$0xff]
    %v83 = vld [vmem:[%s2 + $0x98] sm:$0xff]
    %v84 = vld [vmem:[%s2 + $0xa0] sm:$0xff]
    %v85 = vld [vmem:[%s2 + $0xa8] sm:$0xff]
    %v86 = vld [vmem:[%s2 + $0xb0] sm:$0xff]
    %v87 = vld [vmem:[%s2 + $0xb8] sm:$0xff]
    %v88 = vld [vmem:[%s2 + $0xc0] sm:$0xff]
    %v89 = vld [vmem:[%s2 + $0xc8] sm:$0xff]
    %v90 = vld [vmem:[%s2 + $0xd0] sm:$0xff]
    %v91 = vld [vmem:[%s2 + $0xd8] sm:$0xff]
    %v92 = vld [vmem:[%s2 + $0xe0] sm:$0xff]
    %v93 = vld [vmem:[%s2 + $0xe8] sm:$0xff]
    %v94 = vld [vmem:[%s2 + $0xf0] sm:$0xff]
    %v95 = vld [vmem:[%s2 + $0xf8] sm:$0xff]
    %97 = vset.pattern.permute.xlu0 0
    %98 = vperm.xlu0 %97, %v64
    %v99 = vpop.permute.xlu0 %98
    %102 = vset.pattern.permute.xlu0 0
    %103 = vperm.xlu0 %102, %v65
    %v104 = vpop.permute.xlu0 %103
    %107 = vset.pattern.permute.xlu0 0
    %108 = vperm.xlu0 %107, %v66
    %v109 = vpop.permute.xlu0 %108
    %112 = vset.pattern.permute.xlu0 0
    %113 = vperm.xlu0 %112, %v67
    %v114 = vpop.permute.xlu0 %113
    %117 = vset.pattern.permute.xlu0 0
    %118 = vperm.xlu0 %117, %v68
    %v119 = vpop.permute.xlu0 %118
    %122 = vset.pattern.permute.xlu0 0
    %123 = vperm.xlu0 %122, %v69
    %v124 = vpop.permute.xlu0 %123
    %127 = vset.pattern.permute.xlu0 0
    %128 = vperm.xlu0 %127, %v70
    %v129 = vpop.permute.xlu0 %128
    %132 = vset.pattern.permute.xlu0 0
    %133 = vperm.xlu0 %132, %v71
    %v134 = vpop.permute.xlu0 %133
    %137 = vset.pattern.permute.xlu0 0
    %138 = vperm.xlu0 %137, %v72
    %v139 = vpop.permute.xlu0 %138
    %142 = vset.pattern.permute.xlu0 0
    %143 = vperm.xlu0 %142, %v73
    %v144 = vpop.permute.xlu0 %143
    %147 = vset.pattern.permute.xlu0 0
    %148 = vperm.xlu0 %147, %v74
    %v149 = vpop.permute.xlu0 %148
    %152 = vset.pattern.permute.xlu0 0
    %153 = vperm.xlu0 %152, %v75
    %v154 = vpop.permute.xlu0 %153
    %157 = vset.pattern.permute.xlu0 0
    %158 = vperm.xlu0 %157, %v76
    %v159 = vpop.permute.xlu0 %158
    %162 = vset.pattern.permute.xlu0 0
    %163 = vperm.xlu0 %162, %v77
    %v164 = vpop.permute.xlu0 %163
    %167 = vset.pattern.permute.xlu0 0
    %168 = vperm.xlu0 %167, %v78
    %v169 = vpop.permute.xlu0 %168
    %172 = vset.pattern.permute.xlu0 0
    %173 = vperm.xlu0 %172, %v79
    %v174 = vpop.permute.xlu0 %173
    %177 = vset.pattern.permute.xlu0 0
    %178 = vperm.xlu0 %177, %v80
    %v179 = vpop.permute.xlu0 %178
    %182 = vset.pattern.permute.xlu0 0
    %183 = vperm.xlu0 %182, %v81
    %v184 = vpop.permute.xlu0 %183
    %187 = vset.pattern.permute.xlu0 0
    %188 = vperm.xlu0 %187, %v82
    %v189 = vpop.permute.xlu0 %188
    %192 = vset.pattern.permute.xlu0 0
    %193 = vperm.xlu0 %192, %v83
    %v194 = vpop.permute.xlu0 %193
    %197 = vset.pattern.permute.xlu0 0
    %198 = vperm.xlu0 %197, %v84
    %v199 = vpop.permute.xlu0 %198
    %202 = vset.pattern.permute.xlu0 0
    %203 = vperm.xlu0 %202, %v85
    %v204 = vpop.permute.xlu0 %203
    %207 = vset.pattern.permute.xlu0 0
    %208 = vperm.xlu0 %207, %v86
    %v209 = vpop.permute.xlu0 %208
    %212 = vset.pattern.permute.xlu0 0
    %213 = vperm.xlu0 %212, %v87
    %v214 = vpop.permute.xlu0 %213
    %217 = vset.pattern.permute.xlu0 0
    %218 = vperm.xlu0 %217, %v88
    %v219 = vpop.permute.xlu0 %218
    %222 = vset.pattern.permute.xlu0 0
    %223 = vperm.xlu0 %222, %v89
    %v224 = vpop.permute.xlu0 %223
    %227 = vset.pattern.permute.xlu0 0
    %228 = vperm.xlu0 %227, %v90
    %v229 = vpop.permute.xlu0 %228
    %232 = vset.pattern.permute.xlu0 0
    %233 = vperm.xlu0 %232, %v91
    %v234 = vpop.permute.xlu0 %233
    %237 = vset.pattern.permute.xlu0 0
    %238 = vperm.xlu0 %237, %v92
    %v239 = vpop.permute.xlu0 %238
    %242 = vset.pattern.permute.xlu0 0
    %243 = vperm.xlu0 %242, %v93
    %v244 = vpop.permute.xlu0 %243
    %247 = vset.pattern.permute.xlu0 0
    %248 = vperm.xlu0 %247, %v94
    %v249 = vpop.permute.xlu0 %248
    %252 = vset.pattern.permute.xlu0 0
    %253 = vperm.xlu0 %252, %v95
    %v254 = vpop.permute.xlu0 %253
    %v288 = vunpack.c.l.b16 %v29
    %v289 = vunpack.c.l.b16 %v30
    %v290 = vunpack.c.l.b16 %v31
    %v291 = vunpack.c.l.b16 %v32
    %v292 = vunpack.c.l.b16 %v33
    %v293 = vunpack.c.l.b16 %v34
    %v294 = vunpack.c.l.b16 %v35
    %v295 = vunpack.c.l.b16 %v36
    %v296 = vunpack.c.l.b16 %v37
    %v297 = vunpack.c.l.b16 %v38
    %v298 = vunpack.c.l.b16 %v39
    %v299 = vunpack.c.l.b16 %v40
    %v300 = vunpack.c.l.b16 %v41
    %v301 = vunpack.c.l.b16 %v42
    %v302 = vunpack.c.l.b16 %v43
    %v303 = vunpack.c.l.b16 %v44
    %v304 = vunpack.c.l.b16 %v45
    %v305 = vunpack.c.l.b16 %v46
    %v306 = vunpack.c.l.b16 %v47
    %v307 = vunpack.c.l.b16 %v48
    %v308 = vunpack.c.l.b16 %v49
    %v309 = vunpack.c.l.b16 %v50
    %v310 = vunpack.c.l.b16 %v51
    %v311 = vunpack.c.l.b16 %v52
    %v312 = vunpack.c.l.b16 %v53
    %v313 = vunpack.c.l.b16 %v54
    %v314 = vunpack.c.l.b16 %v55
    %v315 = vunpack.c.l.b16 %v56
    %v316 = vunpack.c.l.b16 %v57
    %v317 = vunpack.c.l.b16 %v58
    %v318 = vunpack.c.l.b16 %v59
    %v319 = vunpack.c.l.b16 %v60
    %v320 = vpack.c.b16 %v289, %v288
    %v321 = vpack.c.b16 %v291, %v290
    %v322 = vpack.c.b16 %v293, %v292
    %v323 = vpack.c.b16 %v295, %v294
    %v324 = vpack.c.b16 %v297, %v296
    %v325 = vpack.c.b16 %v299, %v298
    %v326 = vpack.c.b16 %v301, %v300
    %v327 = vpack.c.b16 %v303, %v302
    %v328 = vpack.c.b16 %v305, %v304
    %v329 = vpack.c.b16 %v307, %v306
    %v330 = vpack.c.b16 %v309, %v308
    %v331 = vpack.c.b16 %v311, %v310
    %v332 = vpack.c.b16 %v313, %v312
    %v333 = vpack.c.b16 %v315, %v314
    %v334 = vpack.c.b16 %v317, %v316
    %v335 = vpack.c.b16 %v319, %v318
    %v339 = vunpack.c.l.b16 %v61
    %v340 = vunpack.c.l.b16 %v62
    %v341 = vunpack.c.l.b16 %v63
    %v342 = vpack.c.b16 %v340, %v339
    %v343 = vpack.c.b16 %v341, %v341
    %vm345 = vcmask 187392
    %v347 = vsel %vm345, %v320, 0
    %v350 = vsel %vm345, %v321, 0
    %v353 = vsel %vm345, %v322, 0
    %v356 = vsel %vm345, %v323, 0
    %v359 = vsel %vm345, %v324, 0
    %v362 = vsel %vm345, %v325, 0
    %v365 = vsel %vm345, %v326, 0
    %v368 = vsel %vm345, %v327, 0
    %v371 = vsel %vm345, %v328, 0
    %v374 = vsel %vm345, %v329, 0
    %v377 = vsel %vm345, %v330, 0
    %v380 = vsel %vm345, %v331, 0
    %v383 = vsel %vm345, %v332, 0
    %v386 = vsel %vm345, %v333, 0
    %v389 = vsel %vm345, %v334, 0
    %v392 = vsel %vm345, %v335, 0
    %vm394 = vcmask 1042432
    %vm395 = vcmask 1043456
    %v396 = vsel %vm394, 4294967295, 65535
    %v397 = vsel %vm395, %v396, 0
    %v399 = vand.u32 %v343, %v397
    %401 = vmatprep.subr.bf16.mxu0 0
    %402 = vmatpush1.bf16.msra.mxu0 %v342
    %403 = vmatprep.subr.bf16.mxu0 0
    %404 = vmatpush1.bf16.msra.mxu0 %v399
    %405 = vmatprep.subr.bf16.mxu0 0
    %406 = vmatpush1.bf16.msra.mxu0 0
    %407 = vmatprep.subr.bf16.mxu0 0
    %408 = vmatpush1.bf16.msra.mxu0 0
    %409 = vmatprep.subr.bf16.mxu0 0
    %410 = vmatpush1.bf16.msra.mxu0 0
    %411 = vmatprep.subr.bf16.mxu0 0
    %412 = vmatpush1.bf16.msra.mxu0 0
    %413 = vmatprep.subr.bf16.mxu0 0
    %414 = vmatpush1.bf16.msra.mxu0 0
    %415 = vmatprep.subr.bf16.mxu0 0
    %416 = vmatpush1.bf16.msra.mxu0 0
    %417 = vmatprep.subr.bf16.mxu0 0
    %418 = vmatpush1.bf16.msra.mxu0 0
    %419 = vmatprep.subr.bf16.mxu0 0
    %420 = vmatpush1.bf16.msra.mxu0 0
    %421 = vmatprep.subr.bf16.mxu0 0
    %422 = vmatpush1.bf16.msra.mxu0 0
    %423 = vmatprep.subr.bf16.mxu0 0
    %424 = vmatpush1.bf16.msra.mxu0 0
    %425 = vmatprep.subr.bf16.mxu0 0
    %426 = vmatpush1.bf16.msra.mxu0 0
    %427 = vmatprep.subr.bf16.mxu0 0
    %428 = vmatpush1.bf16.msra.mxu0 0
    %429 = vmatprep.subr.bf16.mxu0 0
    %430 = vmatpush1.bf16.msra.mxu0 0
    %431 = vmatprep.subr.bf16.mxu0 0
    %432 = vmatpush1.bf16.msra.mxu0 0
    %433 = vmatprep.mubr.bf16.mxu0 0
    %434 = vmatmul.mubr.bf16.gmra.mrb[0].mxu0 %v347
    %v435 = vpop.f32.mrb[0].mxu0
    %v436 = vadd.f32 %v99, %v435
    %v437 = vpop.f32.mrb[0].mxu0
    %v438 = vpop.f32.mrb[0].mxu0
    %v439 = vadd.f32 %v104, %v438
    %v440 = vpop.f32.mrb[0].mxu0
    %441 = vmatprep.mubr.bf16.mxu0 0
    %442 = vmatmul.mubr.bf16.gmra.mrb[0].mxu0 %v350
    %v443 = vpop.f32.mrb[0].mxu0
    %v444 = vadd.f32 %v109, %v443
    %v445 = vpop.f32.mrb[0].mxu0
    %v446 = vpop.f32.mrb[0].mxu0
    %v447 = vadd.f32 %v114, %v446
    %v448 = vpop.f32.mrb[0].mxu0
    %449 = vmatprep.mubr.bf16.mxu0 0
    %450 = vmatmul.mubr.bf16.gmra.mrb[0].mxu0 %v353
    %v451 = vpop.f32.mrb[0].mxu0
    %v452 = vadd.f32 %v119, %v451
    %v453 = vpop.f32.mrb[0].mxu0
    %v454 = vpop.f32.mrb[0].mxu0
    %v455 = vadd.f32 %v124, %v454
    %v456 = vpop.f32.mrb[0].mxu0
    %457 = vmatprep.mubr.bf16.mxu0 0
    %458 = vmatmul.mubr.bf16.gmra.mrb[0].mxu0 %v356
    %v459 = vpop.f32.mrb[0].mxu0
    %v460 = vadd.f32 %v129, %v459
    %v461 = vpop.f32.mrb[0].mxu0
    %v462 = vpop.f32.mrb[0].mxu0
    %v463 = vadd.f32 %v134, %v462
    %v464 = vpop.f32.mrb[0].mxu0
    %465 = vmatprep.mubr.bf16.mxu0 0
    %466 = vmatmul.mubr.bf16.gmra.mrb[0].mxu0 %v359
    %v467 = vpop.f32.mrb[0].mxu0
    %v468 = vadd.f32 %v139, %v467
    %v469 = vpop.f32.mrb[0].mxu0
    %v470 = vpop.f32.mrb[0].mxu0
    %v471 = vadd.f32 %v144, %v470
    %v472 = vpop.f32.mrb[0].mxu0
    %473 = vmatprep.mubr.bf16.mxu0 0
    %474 = vmatmul.mubr.bf16.gmra.mrb[0].mxu0 %v362
    %v475 = vpop.f32.mrb[0].mxu0
    %v476 = vadd.f32 %v149, %v475
    %v477 = vpop.f32.mrb[0].mxu0
    %v478 = vpop.f32.mrb[0].mxu0
    %v479 = vadd.f32 %v154, %v478
    %v480 = vpop.f32.mrb[0].mxu0
    %481 = vmatprep.mubr.bf16.mxu0 0
    %482 = vmatmul.mubr.bf16.gmra.mrb[0].mxu0 %v365
    %v483 = vpop.f32.mrb[0].mxu0
    %v484 = vadd.f32 %v159, %v483
    %v485 = vpop.f32.mrb[0].mxu0
    %v486 = vpop.f32.mrb[0].mxu0
    %v487 = vadd.f32 %v164, %v486
    %v488 = vpop.f32.mrb[0].mxu0
    %489 = vmatprep.mubr.bf16.mxu0 0
    %490 = vmatmul.mubr.bf16.gmra.mrb[0].mxu0 %v368
    %v491 = vpop.f32.mrb[0].mxu0
    %v492 = vadd.f32 %v169, %v491
    %v493 = vpop.f32.mrb[0].mxu0
    %v494 = vpop.f32.mrb[0].mxu0
    %v495 = vadd.f32 %v174, %v494
    %v496 = vpop.f32.mrb[0].mxu0
    %497 = vmatprep.mubr.bf16.mxu0 0
    %498 = vmatmul.mubr.bf16.gmra.mrb[0].mxu0 %v371
    %v499 = vpop.f32.mrb[0].mxu0
    %v500 = vadd.f32 %v179, %v499
    %v501 = vpop.f32.mrb[0].mxu0
    %v502 = vpop.f32.mrb[0].mxu0
    %v503 = vadd.f32 %v184, %v502
    %v504 = vpop.f32.mrb[0].mxu0
    %505 = vmatprep.mubr.bf16.mxu0 0
    %506 = vmatmul.mubr.bf16.gmra.mrb[0].mxu0 %v374
    %v507 = vpop.f32.mrb[0].mxu0
    %v508 = vadd.f32 %v189, %v507
    %v509 = vpop.f32.mrb[0].mxu0
    %v510 = vpop.f32.mrb[0].mxu0
    %v511 = vadd.f32 %v194, %v510
    %v512 = vpop.f32.mrb[0].mxu0
    %513 = vmatprep.mubr.bf16.mxu0 0
    %514 = vmatmul.mubr.bf16.gmra.mrb[0].mxu0 %v377
    %v515 = vpop.f32.mrb[0].mxu0
    %v516 = vadd.f32 %v199, %v515
    %v517 = vpop.f32.mrb[0].mxu0
    %v518 = vpop.f32.mrb[0].mxu0
    %v519 = vadd.f32 %v204, %v518
    %v520 = vpop.f32.mrb[0].mxu0
    %521 = vmatprep.mubr.bf16.mxu0 0
    %522 = vmatmul.mubr.bf16.gmra.mrb[0].mxu0 %v380
    %v523 = vpop.f32.mrb[0].mxu0
    %v524 = vadd.f32 %v209, %v523
    %v525 = vpop.f32.mrb[0].mxu0
    %v526 = vpop.f32.mrb[0].mxu0
    %v527 = vadd.f32 %v214, %v526
    %v528 = vpop.f32.mrb[0].mxu0
    %529 = vmatprep.mubr.bf16.mxu0 0
    %530 = vmatmul.mubr.bf16.gmra.mrb[0].mxu0 %v383
    %v531 = vpop.f32.mrb[0].mxu0
    %v532 = vadd.f32 %v219, %v531
    %v533 = vpop.f32.mrb[0].mxu0
    %v534 = vpop.f32.mrb[0].mxu0
    %v535 = vadd.f32 %v224, %v534
    %v536 = vpop.f32.mrb[0].mxu0
    %537 = vmatprep.mubr.bf16.mxu0 0
    %538 = vmatmul.mubr.bf16.gmra.mrb[0].mxu0 %v386
    %v539 = vpop.f32.mrb[0].mxu0
    %v540 = vadd.f32 %v229, %v539
    %v541 = vpop.f32.mrb[0].mxu0
    %v542 = vpop.f32.mrb[0].mxu0
    %v543 = vadd.f32 %v234, %v542
    %v544 = vpop.f32.mrb[0].mxu0
    %545 = vmatprep.mubr.bf16.mxu0 0
    %546 = vmatmul.mubr.bf16.gmra.mrb[0].mxu0 %v389
    %v547 = vpop.f32.mrb[0].mxu0
    %v548 = vadd.f32 %v239, %v547
    %v549 = vpop.f32.mrb[0].mxu0
    %v550 = vpop.f32.mrb[0].mxu0
    %v551 = vadd.f32 %v244, %v550
    %v552 = vpop.f32.mrb[0].mxu0
    %553 = vmatprep.mubr.bf16.mxu0 0
    %554 = vmatmul.mubr.bf16.gmra.mrb[0].mxu0 %v392
    %v555 = vpop.f32.mrb[0].mxu0
    %v556 = vadd.f32 %v249, %v555
    %v557 = vpop.f32.mrb[0].mxu0
    %v558 = vpop.f32.mrb[0].mxu0
    %v559 = vadd.f32 %v254, %v558
    %v560 = vpop.f32.mrb[0].mxu0
    %561 = vdwg.mxu0
    %v562 = vmax.f32 %v436, 0.0
    %v563 = vmax.f32 %v439, 0.0
    %v564 = vmax.f32 %v444, 0.0
    %v565 = vmax.f32 %v447, 0.0
    %v566 = vmax.f32 %v452, 0.0
    %v567 = vmax.f32 %v455, 0.0
    %v568 = vmax.f32 %v460, 0.0
    %v569 = vmax.f32 %v463, 0.0
    %v570 = vmax.f32 %v468, 0.0
    %v571 = vmax.f32 %v471, 0.0
    %v572 = vmax.f32 %v476, 0.0
    %v573 = vmax.f32 %v479, 0.0
    %v574 = vmax.f32 %v484, 0.0
    %v575 = vmax.f32 %v487, 0.0
    %v576 = vmax.f32 %v492, 0.0
    %v577 = vmax.f32 %v495, 0.0
    %v578 = vmax.f32 %v500, 0.0
    %v579 = vmax.f32 %v503, 0.0
    %v580 = vmax.f32 %v508, 0.0
    %v581 = vmax.f32 %v511, 0.0
    %v582 = vmax.f32 %v516, 0.0
    %v583 = vmax.f32 %v519, 0.0
    %v584 = vmax.f32 %v524, 0.0
    %v585 = vmax.f32 %v527, 0.0
    %v586 = vmax.f32 %v532, 0.0
    %v587 = vmax.f32 %v535, 0.0
    %v588 = vmax.f32 %v540, 0.0
    %v589 = vmax.f32 %v543, 0.0
    %v590 = vmax.f32 %v548, 0.0
    %v591 = vmax.f32 %v551, 0.0
    %v592 = vmax.f32 %v556, 0.0
    %v593 = vmax.f32 %v559, 0.0
    %v594 = vpack.c.bf16 %v563, %v562
    %v595 = vpack.c.bf16 %v565, %v564
    %v596 = vpack.c.bf16 %v567, %v566
    %v597 = vpack.c.bf16 %v569, %v568
    %v598 = vpack.c.bf16 %v571, %v570
    %v599 = vpack.c.bf16 %v573, %v572
    %v600 = vpack.c.bf16 %v575, %v574
    %v601 = vpack.c.bf16 %v577, %v576
    %v602 = vpack.c.bf16 %v579, %v578
    %v603 = vpack.c.bf16 %v581, %v580
    %v604 = vpack.c.bf16 %v583, %v582
    %v605 = vpack.c.bf16 %v585, %v584
    %v606 = vpack.c.bf16 %v587, %v586
    %v607 = vpack.c.bf16 %v589, %v588
    %v608 = vpack.c.bf16 %v591, %v590
    %v609 = vpack.c.bf16 %v593, %v592
    %v610 = vld [vmem:[%s3] sm:$0xff]
    %v611 = vld [vmem:[%s3 + $0x8] sm:$0xff]
    %v612 = vld [vmem:[%s3 + $0x10] sm:$0xff]
    %v613 = vld [vmem:[%s3 + $0x18] sm:$0xff]
    %v614 = vld [vmem:[%s3 + $0x20] sm:$0xff]
    %v615 = vld [vmem:[%s3 + $0x28] sm:$0xff]
    %v616 = vld [vmem:[%s3 + $0x30] sm:$0xff]
    %v617 = vld [vmem:[%s3 + $0x38] sm:$0xff]
    %v618 = vld [vmem:[%s3 + $0x40] sm:$0xff]
    %v619 = vld [vmem:[%s3 + $0x48] sm:$0xff]
    %v620 = vld [vmem:[%s3 + $0x50] sm:$0xff]
    %v621 = vld [vmem:[%s3 + $0x58] sm:$0xff]
    %v622 = vld [vmem:[%s3 + $0x60] sm:$0xff]
    %v623 = vld [vmem:[%s3 + $0x68] sm:$0xff]
    %v624 = vld [vmem:[%s3 + $0x70] sm:$0xff]
    %v625 = vld [vmem:[%s3 + $0x78] sm:$0xff]
    %v626 = vld [vmem:[%s3 + $0x80] sm:$0xff]
    %v627 = vld [vmem:[%s3 + $0x88] sm:$0xff]
    %v628 = vld [vmem:[%s3 + $0x90] sm:$0xff]
    %v629 = vld [vmem:[%s3 + $0x98] sm:$0xff]
    %v630 = vld [vmem:[%s3 + $0xa0] sm:$0xff]
    %v631 = vld [vmem:[%s3 + $0xa8] sm:$0xff]
    %v632 = vld [vmem:[%s3 + $0xb0] sm:$0xff]
    %v633 = vld [vmem:[%s3 + $0xb8] sm:$0xff]
    %v634 = vld [vmem:[%s3 + $0xc0] sm:$0xff]
    %v635 = vld [vmem:[%s3 + $0xc8] sm:$0xff]
    %v636 = vld [vmem:[%s3 + $0xd0] sm:$0xff]
    %v637 = vld [vmem:[%s3 + $0xd8] sm:$0xff]
    %v638 = vld [vmem:[%s3 + $0xe0] sm:$0xff]
    %v639 = vld [vmem:[%s3 + $0xe8] sm:$0xff]
    %v640 = vld [vmem:[%s3 + $0xf0] sm:$0xff]
    %v641 = vld [vmem:[%s3 + $0xf8] sm:$0xff]
    %v642 = vld [vmem:[%s4] sm:$0xff]
    %v643 = vld [vmem:[%s4 + $0x8] sm:$0xff]
    %v644 = vld [vmem:[%s4 + $0x10] sm:$0xff]
    %v645 = vld [vmem:[%s4 + $0x18] sm:$0xff]
    %v646 = vld [vmem:[%s4 + $0x20] sm:$0xff]
    %v647 = vld [vmem:[%s4 + $0x28] sm:$0xff]
    %v648 = vld [vmem:[%s4 + $0x30] sm:$0xff]
    %v649 = vld [vmem:[%s4 + $0x38] sm:$0xff]
    %v650 = vld [vmem:[%s4 + $0x40] sm:$0xff]
    %v651 = vld [vmem:[%s4 + $0x48] sm:$0xff]
    %v652 = vld [vmem:[%s4 + $0x50] sm:$0xff]
    %v653 = vld [vmem:[%s4 + $0x58] sm:$0xff]
    %v654 = vld [vmem:[%s4 + $0x60] sm:$0xff]
    %v655 = vld [vmem:[%s4 + $0x68] sm:$0xff]
    %v656 = vld [vmem:[%s4 + $0x70] sm:$0xff]
    %v657 = vld [vmem:[%s4 + $0x78] sm:$0xff]
    %v658 = vld [vmem:[%s4 + $0x80] sm:$0xff]
    %v659 = vld [vmem:[%s4 + $0x88] sm:$0xff]
    %v660 = vld [vmem:[%s4 + $0x90] sm:$0xff]
    %v661 = vld [vmem:[%s4 + $0x98] sm:$0xff]
    %v662 = vld [vmem:[%s4 + $0xa0] sm:$0xff]
    %v663 = vld [vmem:[%s4 + $0xa8] sm:$0xff]
    %v664 = vld [vmem:[%s4 + $0xb0] sm:$0xff]
    %v665 = vld [vmem:[%s4 + $0xb8] sm:$0xff]
    %v666 = vld [vmem:[%s4 + $0xc0] sm:$0xff]
    %v667 = vld [vmem:[%s4 + $0xc8] sm:$0xff]
    %v668 = vld [vmem:[%s4 + $0xd0] sm:$0xff]
    %v669 = vld [vmem:[%s4 + $0xd8] sm:$0xff]
    %v670 = vld [vmem:[%s4 + $0xe0] sm:$0xff]
    %v671 = vld [vmem:[%s4 + $0xe8] sm:$0xff]
    %v672 = vld [vmem:[%s4 + $0xf0] sm:$0xff]
    %v673 = vld [vmem:[%s4 + $0xf8] sm:$0xff]
    %675 = vset.pattern.permute.xlu0 0
    %676 = vperm.xlu0 %675, %v642
    %v677 = vpop.permute.xlu0 %676
    %680 = vset.pattern.permute.xlu0 0
    %681 = vperm.xlu0 %680, %v643
    %v682 = vpop.permute.xlu0 %681
    %685 = vset.pattern.permute.xlu0 0
    %686 = vperm.xlu0 %685, %v644
    %v687 = vpop.permute.xlu0 %686
    %690 = vset.pattern.permute.xlu0 0
    %691 = vperm.xlu0 %690, %v645
    %v692 = vpop.permute.xlu0 %691
    %695 = vset.pattern.permute.xlu0 0
    %696 = vperm.xlu0 %695, %v646
    %v697 = vpop.permute.xlu0 %696
    %700 = vset.pattern.permute.xlu0 0
    %701 = vperm.xlu0 %700, %v647
    %v702 = vpop.permute.xlu0 %701
    %705 = vset.pattern.permute.xlu0 0
    %706 = vperm.xlu0 %705, %v648
    %v707 = vpop.permute.xlu0 %706
    %710 = vset.pattern.permute.xlu0 0
    %711 = vperm.xlu0 %710, %v649
    %v712 = vpop.permute.xlu0 %711
    %715 = vset.pattern.permute.xlu0 0
    %716 = vperm.xlu0 %715, %v650
    %v717 = vpop.permute.xlu0 %716
    %720 = vset.pattern.permute.xlu0 0
    %721 = vperm.xlu0 %720, %v651
    %v722 = vpop.permute.xlu0 %721
    %725 = vset.pattern.permute.xlu0 0
    %726 = vperm.xlu0 %725, %v652
    %v727 = vpop.permute.xlu0 %726
    %730 = vset.pattern.permute.xlu0 0
    %731 = vperm.xlu0 %730, %v653
    %v732 = vpop.permute.xlu0 %731
    %735 = vset.pattern.permute.xlu0 0
    %736 = vperm.xlu0 %735, %v654
    %v737 = vpop.permute.xlu0 %736
    %740 = vset.pattern.permute.xlu0 0
    %741 = vperm.xlu0 %740, %v655
    %v742 = vpop.permute.xlu0 %741
    %745 = vset.pattern.permute.xlu0 0
    %746 = vperm.xlu0 %745, %v656
    %v747 = vpop.permute.xlu0 %746
    %750 = vset.pattern.permute.xlu0 0
    %751 = vperm.xlu0 %750, %v657
    %v752 = vpop.permute.xlu0 %751
    %755 = vset.pattern.permute.xlu0 0
    %756 = vperm.xlu0 %755, %v658
    %v757 = vpop.permute.xlu0 %756
    %760 = vset.pattern.permute.xlu0 0
    %761 = vperm.xlu0 %760, %v659
    %v762 = vpop.permute.xlu0 %761
    %765 = vset.pattern.permute.xlu0 0
    %766 = vperm.xlu0 %765, %v660
    %v767 = vpop.permute.xlu0 %766
    %770 = vset.pattern.permute.xlu0 0
    %771 = vperm.xlu0 %770, %v661
    %v772 = vpop.permute.xlu0 %771
    %775 = vset.pattern.permute.xlu0 0
    %776 = vperm.xlu0 %775, %v662
    %v777 = vpop.permute.xlu0 %776
    %780 = vset.pattern.permute.xlu0 0
    %781 = vperm.xlu0 %780, %v663
    %v782 = vpop.permute.xlu0 %781
    %785 = vset.pattern.permute.xlu0 0
    %786 = vperm.xlu0 %785, %v664
    %v787 = vpop.permute.xlu0 %786
    %790 = vset.pattern.permute.xlu0 0
    %791 = vperm.xlu0 %790, %v665
    %v792 = vpop.permute.xlu0 %791
    %795 = vset.pattern.permute.xlu0 0
    %796 = vperm.xlu0 %795, %v666
    %v797 = vpop.permute.xlu0 %796
    %800 = vset.pattern.permute.xlu0 0
    %801 = vperm.xlu0 %800, %v667
    %v802 = vpop.permute.xlu0 %801
    %805 = vset.pattern.permute.xlu0 0
    %806 = vperm.xlu0 %805, %v668
    %v807 = vpop.permute.xlu0 %806
    %810 = vset.pattern.permute.xlu0 0
    %811 = vperm.xlu0 %810, %v669
    %v812 = vpop.permute.xlu0 %811
    %815 = vset.pattern.permute.xlu0 0
    %816 = vperm.xlu0 %815, %v670
    %v817 = vpop.permute.xlu0 %816
    %820 = vset.pattern.permute.xlu0 0
    %821 = vperm.xlu0 %820, %v671
    %v822 = vpop.permute.xlu0 %821
    %825 = vset.pattern.permute.xlu0 0
    %826 = vperm.xlu0 %825, %v672
    %v827 = vpop.permute.xlu0 %826
    %830 = vset.pattern.permute.xlu0 0
    %831 = vperm.xlu0 %830, %v673
    %v832 = vpop.permute.xlu0 %831
    %v866 = vunpack.c.l.b16 %v610
    %v867 = vunpack.c.h.b16 %v610
    %v868 = vunpack.c.l.b16 %v611
    %v869 = vunpack.c.h.b16 %v611
    %v870 = vunpack.c.l.b16 %v612
    %v871 = vunpack.c.h.b16 %v612
    %v872 = vunpack.c.l.b16 %v613
    %v873 = vunpack.c.h.b16 %v613
    %v874 = vunpack.c.l.b16 %v614
    %v875 = vunpack.c.h.b16 %v614
    %v876 = vunpack.c.l.b16 %v615
    %v877 = vunpack.c.h.b16 %v615
    %v878 = vunpack.c.l.b16 %v616
    %v879 = vunpack.c.h.b16 %v616
    %v880 = vunpack.c.l.b16 %v617
    %v881 = vunpack.c.h.b16 %v617
    %v882 = vunpack.c.l.b16 %v618
    %v883 = vunpack.c.h.b16 %v618
    %v884 = vunpack.c.l.b16 %v619
    %v885 = vunpack.c.h.b16 %v619
    %v886 = vunpack.c.l.b16 %v620
    %v887 = vunpack.c.h.b16 %v620
    %v888 = vunpack.c.l.b16 %v621
    %v889 = vunpack.c.h.b16 %v621
    %v890 = vunpack.c.l.b16 %v622
    %v891 = vunpack.c.h.b16 %v622
    %v892 = vunpack.c.l.b16 %v623
    %v893 = vunpack.c.h.b16 %v623
    %v894 = vunpack.c.l.b16 %v624
    %v895 = vunpack.c.h.b16 %v624
    %v896 = vunpack.c.l.b16 %v625
    %v897 = vunpack.c.h.b16 %v625
    %v898 = vunpack.c.l.b16 %v626
    %v899 = vunpack.c.h.b16 %v626
    %v900 = vunpack.c.l.b16 %v627
    %v901 = vunpack.c.h.b16 %v627
    %v902 = vunpack.c.l.b16 %v628
    %v903 = vunpack.c.h.b16 %v628
    %v904 = vunpack.c.l.b16 %v629
    %v905 = vunpack.c.h.b16 %v629
    %v906 = vunpack.c.l.b16 %v630
    %v907 = vunpack.c.h.b16 %v630
    %v908 = vunpack.c.l.b16 %v631
    %v909 = vunpack.c.h.b16 %v631
    %v910 = vunpack.c.l.b16 %v632
    %v911 = vunpack.c.h.b16 %v632
    %v912 = vunpack.c.l.b16 %v633
    %v913 = vunpack.c.h.b16 %v633
    %v914 = vunpack.c.l.b16 %v634
    %v915 = vunpack.c.h.b16 %v634
    %v916 = vunpack.c.l.b16 %v635
    %v917 = vunpack.c.h.b16 %v635
    %v918 = vunpack.c.l.b16 %v636
    %v919 = vunpack.c.h.b16 %v636
    %v920 = vunpack.c.l.b16 %v637
    %v921 = vunpack.c.h.b16 %v637
    %v922 = vunpack.c.l.b16 %v638
    %v923 = vunpack.c.h.b16 %v638
    %v924 = vunpack.c.l.b16 %v639
    %v925 = vunpack.c.h.b16 %v639
    %v926 = vunpack.c.l.b16 %v640
    %v927 = vunpack.c.h.b16 %v640
    %v928 = vunpack.c.l.b16 %v641
    %v929 = vunpack.c.h.b16 %v641
    %v930 = vpack.c.b16 %v868, %v866
    %v931 = vpack.c.b16 %v869, %v867
    %v932 = vpack.c.b16 %v872, %v870
    %v933 = vpack.c.b16 %v873, %v871
    %v934 = vpack.c.b16 %v876, %v874
    %v935 = vpack.c.b16 %v877, %v875
    %v936 = vpack.c.b16 %v880, %v878
    %v937 = vpack.c.b16 %v881, %v879
    %v938 = vpack.c.b16 %v884, %v882
    %v939 = vpack.c.b16 %v885, %v883
    %v940 = vpack.c.b16 %v888, %v886
    %v941 = vpack.c.b16 %v889, %v887
    %v942 = vpack.c.b16 %v892, %v890
    %v943 = vpack.c.b16 %v893, %v891
    %v944 = vpack.c.b16 %v896, %v894
    %v945 = vpack.c.b16 %v897, %v895
    %v946 = vpack.c.b16 %v900, %v898
    %v947 = vpack.c.b16 %v901, %v899
    %v948 = vpack.c.b16 %v904, %v902
    %v949 = vpack.c.b16 %v905, %v903
    %v950 = vpack.c.b16 %v908, %v906
    %v951 = vpack.c.b16 %v909, %v907
    %v952 = vpack.c.b16 %v912, %v910
    %v953 = vpack.c.b16 %v913, %v911
    %v954 = vpack.c.b16 %v916, %v914
    %v955 = vpack.c.b16 %v917, %v915
    %v956 = vpack.c.b16 %v920, %v918
    %v957 = vpack.c.b16 %v921, %v919
    %v958 = vpack.c.b16 %v924, %v922
    %v959 = vpack.c.b16 %v925, %v923
    %v960 = vpack.c.b16 %v928, %v926
    %v961 = vpack.c.b16 %v929, %v927
    %994 = vmatprep.subr.bf16.mxu0 0
    %995 = vmatpush1.bf16.msra.mxu0 %v594
    %996 = vmatprep.subr.bf16.mxu0 0
    %997 = vmatpush1.bf16.msra.mxu0 %v595
    %998 = vmatprep.subr.bf16.mxu0 0
    %999 = vmatpush1.bf16.msra.mxu0 %v596
    %1000 = vmatprep.subr.bf16.mxu0 0
    %1001 = vmatpush1.bf16.msra.mxu0 %v597
    %1002 = vmatprep.subr.bf16.mxu0 0
    %1003 = vmatpush1.bf16.msra.mxu0 %v598
    %1004 = vmatprep.subr.bf16.mxu0 0
    %1005 = vmatpush1.bf16.msra.mxu0 %v599
    %1006 = vmatprep.subr.bf16.mxu0 0
    %1007 = vmatpush1.bf16.msra.mxu0 %v600
    %1008 = vmatprep.subr.bf16.mxu0 0
    %1009 = vmatpush1.bf16.msra.mxu0 %v601
    %1010 = vmatprep.subr.bf16.mxu0 0
    %1011 = vmatpush1.bf16.msra.mxu0 %v602
    %1012 = vmatprep.subr.bf16.mxu0 0
    %1013 = vmatpush1.bf16.msra.mxu0 %v603
    %1014 = vmatprep.subr.bf16.mxu0 0
    %1015 = vmatpush1.bf16.msra.mxu0 %v604
    %1016 = vmatprep.subr.bf16.mxu0 0
    %1017 = vmatpush1.bf16.msra.mxu0 %v605
    %1018 = vmatprep.subr.bf16.mxu0 0
    %1019 = vmatpush1.bf16.msra.mxu0 %v606
    %1020 = vmatprep.subr.bf16.mxu0 0
    %1021 = vmatpush1.bf16.msra.mxu0 %v607
    %1022 = vmatprep.subr.bf16.mxu0 0
    %1023 = vmatpush1.bf16.msra.mxu0 %v608
    %1024 = vmatprep.subr.bf16.mxu0 0
    %1025 = vmatpush1.bf16.msra.mxu0 %v609
    %1026 = vmatprep.mubr.bf16.mxu0 %v931
    %1027 = vmatmul.mubr.bf16.gmra.mrb[0].mxu0 %v930
    %v1028 = vpop.f32.mrb[0].mxu0
    %v1029 = vadd.f32 %v677, %v1028
    %v1030 = vpop.f32.mrb[0].mxu0
    %v1031 = vpop.f32.mrb[0].mxu0
    %v1032 = vadd.f32 %v682, %v1031
    %v1033 = vpop.f32.mrb[0].mxu0
    %1034 = vmatprep.mubr.bf16.mxu0 %v933
    %1035 = vmatmul.mubr.bf16.gmra.mrb[0].mxu0 %v932
    %v1036 = vpop.f32.mrb[0].mxu0
    %v1037 = vadd.f32 %v687, %v1036
    %v1038 = vpop.f32.mrb[0].mxu0
    %v1039 = vpop.f32.mrb[0].mxu0
    %v1040 = vadd.f32 %v692, %v1039
    %v1041 = vpop.f32.mrb[0].mxu0
    %1042 = vmatprep.mubr.bf16.mxu0 %v935
    %1043 = vmatmul.mubr.bf16.gmra.mrb[0].mxu0 %v934
    %v1044 = vpop.f32.mrb[0].mxu0
    %v1045 = vadd.f32 %v697, %v1044
    %v1046 = vpop.f32.mrb[0].mxu0
    %v1047 = vpop.f32.mrb[0].mxu0
    %v1048 = vadd.f32 %v702, %v1047
    %v1049 = vpop.f32.mrb[0].mxu0
    %1050 = vmatprep.mubr.bf16.mxu0 %v937
    %1051 = vmatmul.mubr.bf16.gmra.mrb[0].mxu0 %v936
    %v1052 = vpop.f32.mrb[0].mxu0
    %v1053 = vadd.f32 %v707, %v1052
    %v1054 = vpop.f32.mrb[0].mxu0
    %v1055 = vpop.f32.mrb[0].mxu0
    %v1056 = vadd.f32 %v712, %v1055
    %v1057 = vpop.f32.mrb[0].mxu0
    %1058 = vmatprep.mubr.bf16.mxu0 %v939
    %1059 = vmatmul.mubr.bf16.gmra.mrb[0].mxu0 %v938
    %v1060 = vpop.f32.mrb[0].mxu0
    %v1061 = vadd.f32 %v717, %v1060
    %v1062 = vpop.f32.mrb[0].mxu0
    %v1063 = vpop.f32.mrb[0].mxu0
    %v1064 = vadd.f32 %v722, %v1063
    %v1065 = vpop.f32.mrb[0].mxu0
    %1066 = vmatprep.mubr.bf16.mxu0 %v941
    %1067 = vmatmul.mubr.bf16.gmra.mrb[0].mxu0 %v940
    %v1068 = vpop.f32.mrb[0].mxu0
    %v1069 = vadd.f32 %v727, %v1068
    %v1070 = vpop.f32.mrb[0].mxu0
    %v1071 = vpop.f32.mrb[0].mxu0
    %v1072 = vadd.f32 %v732, %v1071
    %v1073 = vpop.f32.mrb[0].mxu0
    %1074 = vmatprep.mubr.bf16.mxu0 %v943
    %1075 = vmatmul.mubr.bf16.gmra.mrb[0].mxu0 %v942
    %v1076 = vpop.f32.mrb[0].mxu0
    %v1077 = vadd.f32 %v737, %v1076
    %v1078 = vpop.f32.mrb[0].mxu0
    %v1079 = vpop.f32.mrb[0].mxu0
    %v1080 = vadd.f32 %v742, %v1079
    %v1081 = vpop.f32.mrb[0].mxu0
    %1082 = vmatprep.mubr.bf16.mxu0 %v945
    %1083 = vmatmul.mubr.bf16.gmra.mrb[0].mxu0 %v944
    %v1084 = vpop.f32.mrb[0].mxu0
    %v1085 = vadd.f32 %v747, %v1084
    %v1086 = vpop.f32.mrb[0].mxu0
    %v1087 = vpop.f32.mrb[0].mxu0
    %v1088 = vadd.f32 %v752, %v1087
    %v1089 = vpop.f32.mrb[0].mxu0
    %1090 = vmatprep.mubr.bf16.mxu0 %v947
    %1091 = vmatmul.mubr.bf16.gmra.mrb[0].mxu0 %v946
    %v1092 = vpop.f32.mrb[0].mxu0
    %v1093 = vadd.f32 %v757, %v1092
    %v1094 = vpop.f32.mrb[0].mxu0
    %v1095 = vpop.f32.mrb[0].mxu0
    %v1096 = vadd.f32 %v762, %v1095
    %v1097 = vpop.f32.mrb[0].mxu0
    %1098 = vmatprep.mubr.bf16.mxu0 %v949
    %1099 = vmatmul.mubr.bf16.gmra.mrb[0].mxu0 %v948
    %v1100 = vpop.f32.mrb[0].mxu0
    %v1101 = vadd.f32 %v767, %v1100
    %v1102 = vpop.f32.mrb[0].mxu0
    %v1103 = vpop.f32.mrb[0].mxu0
    %v1104 = vadd.f32 %v772, %v1103
    %v1105 = vpop.f32.mrb[0].mxu0
    %1106 = vmatprep.mubr.bf16.mxu0 %v951
    %1107 = vmatmul.mubr.bf16.gmra.mrb[0].mxu0 %v950
    %v1108 = vpop.f32.mrb[0].mxu0
    %v1109 = vadd.f32 %v777, %v1108
    %v1110 = vpop.f32.mrb[0].mxu0
    %v1111 = vpop.f32.mrb[0].mxu0
    %v1112 = vadd.f32 %v782, %v1111
    %v1113 = vpop.f32.mrb[0].mxu0
    %1114 = vmatprep.mubr.bf16.mxu0 %v953
    %1115 = vmatmul.mubr.bf16.gmra.mrb[0].mxu0 %v952
    %v1116 = vpop.f32.mrb[0].mxu0
    %v1117 = vadd.f32 %v787, %v1116
    %v1118 = vpop.f32.mrb[0].mxu0
    %v1119 = vpop.f32.mrb[0].mxu0
    %v1120 = vadd.f32 %v792, %v1119
    %v1121 = vpop.f32.mrb[0].mxu0
    %1122 = vmatprep.mubr.bf16.mxu0 %v955
    %1123 = vmatmul.mubr.bf16.gmra.mrb[0].mxu0 %v954
    %v1124 = vpop.f32.mrb[0].mxu0
    %v1125 = vadd.f32 %v797, %v1124
    %v1126 = vpop.f32.mrb[0].mxu0
    %v1127 = vpop.f32.mrb[0].mxu0
    %v1128 = vadd.f32 %v802, %v1127
    %v1129 = vpop.f32.mrb[0].mxu0
    %1130 = vmatprep.mubr.bf16.mxu0 %v957
    %1131 = vmatmul.mubr.bf16.gmra.mrb[0].mxu0 %v956
    %v1132 = vpop.f32.mrb[0].mxu0
    %v1133 = vadd.f32 %v807, %v1132
    %v1134 = vpop.f32.mrb[0].mxu0
    %v1135 = vpop.f32.mrb[0].mxu0
    %v1136 = vadd.f32 %v812, %v1135
    %v1137 = vpop.f32.mrb[0].mxu0
    %1138 = vmatprep.mubr.bf16.mxu0 %v959
    %1139 = vmatmul.mubr.bf16.gmra.mrb[0].mxu0 %v958
    %v1140 = vpop.f32.mrb[0].mxu0
    %v1141 = vadd.f32 %v817, %v1140
    %v1142 = vpop.f32.mrb[0].mxu0
    %v1143 = vpop.f32.mrb[0].mxu0
    %v1144 = vadd.f32 %v822, %v1143
    %v1145 = vpop.f32.mrb[0].mxu0
    %1146 = vmatprep.mubr.bf16.mxu0 %v961
    %1147 = vmatmul.mubr.bf16.gmra.mrb[0].mxu0 %v960
    %v1148 = vpop.f32.mrb[0].mxu0
    %v1149 = vadd.f32 %v827, %v1148
    %v1150 = vpop.f32.mrb[0].mxu0
    %v1151 = vpop.f32.mrb[0].mxu0
    %v1152 = vadd.f32 %v832, %v1151
    %v1153 = vpop.f32.mrb[0].mxu0
    %1154 = vdwg.mxu0
    %v1155 = vmax.f32 %v1029, 0.0
    %v1156 = vmax.f32 %v1032, 0.0
    %v1157 = vmax.f32 %v1037, 0.0
    %v1158 = vmax.f32 %v1040, 0.0
    %v1159 = vmax.f32 %v1045, 0.0
    %v1160 = vmax.f32 %v1048, 0.0
    %v1161 = vmax.f32 %v1053, 0.0
    %v1162 = vmax.f32 %v1056, 0.0
    %v1163 = vmax.f32 %v1061, 0.0
    %v1164 = vmax.f32 %v1064, 0.0
    %v1165 = vmax.f32 %v1069, 0.0
    %v1166 = vmax.f32 %v1072, 0.0
    %v1167 = vmax.f32 %v1077, 0.0
    %v1168 = vmax.f32 %v1080, 0.0
    %v1169 = vmax.f32 %v1085, 0.0
    %v1170 = vmax.f32 %v1088, 0.0
    %v1171 = vmax.f32 %v1093, 0.0
    %v1172 = vmax.f32 %v1096, 0.0
    %v1173 = vmax.f32 %v1101, 0.0
    %v1174 = vmax.f32 %v1104, 0.0
    %v1175 = vmax.f32 %v1109, 0.0
    %v1176 = vmax.f32 %v1112, 0.0
    %v1177 = vmax.f32 %v1117, 0.0
    %v1178 = vmax.f32 %v1120, 0.0
    %v1179 = vmax.f32 %v1125, 0.0
    %v1180 = vmax.f32 %v1128, 0.0
    %v1181 = vmax.f32 %v1133, 0.0
    %v1182 = vmax.f32 %v1136, 0.0
    %v1183 = vmax.f32 %v1141, 0.0
    %v1184 = vmax.f32 %v1144, 0.0
    %v1185 = vmax.f32 %v1149, 0.0
    %v1186 = vmax.f32 %v1152, 0.0
    %v1187 = vpack.c.bf16 %v1156, %v1155
    %v1188 = vpack.c.bf16 %v1158, %v1157
    %v1189 = vpack.c.bf16 %v1160, %v1159
    %v1190 = vpack.c.bf16 %v1162, %v1161
    %v1191 = vpack.c.bf16 %v1164, %v1163
    %v1192 = vpack.c.bf16 %v1166, %v1165
    %v1193 = vpack.c.bf16 %v1168, %v1167
    %v1194 = vpack.c.bf16 %v1170, %v1169
    %v1195 = vpack.c.bf16 %v1172, %v1171
    %v1196 = vpack.c.bf16 %v1174, %v1173
    %v1197 = vpack.c.bf16 %v1176, %v1175
    %v1198 = vpack.c.bf16 %v1178, %v1177
    %v1199 = vpack.c.bf16 %v1180, %v1179
    %v1200 = vpack.c.bf16 %v1182, %v1181
    %v1201 = vpack.c.bf16 %v1184, %v1183
    %v1202 = vpack.c.bf16 %v1186, %v1185
    %v1203 = vld [vmem:[%s5] sm:$0xff]
    %v1204 = vld [vmem:[%s5 + $0x8] sm:$0xff]
    %v1205 = vld [vmem:[%s5 + $0x10] sm:$0xff]
    %v1206 = vld [vmem:[%s5 + $0x18] sm:$0xff]
    %v1207 = vld [vmem:[%s5 + $0x20] sm:$0xff]
    %v1208 = vld [vmem:[%s5 + $0x28] sm:$0xff]
    %v1209 = vld [vmem:[%s5 + $0x30] sm:$0xff]
    %v1210 = vld [vmem:[%s5 + $0x38] sm:$0xff]
    %v1211 = vld [vmem:[%s5 + $0x40] sm:$0xff]
    %v1212 = vld [vmem:[%s5 + $0x48] sm:$0xff]
    %v1213 = vld [vmem:[%s5 + $0x50] sm:$0xff]
    %v1214 = vld [vmem:[%s5 + $0x58] sm:$0xff]
    %v1215 = vld [vmem:[%s5 + $0x60] sm:$0xff]
    %v1216 = vld [vmem:[%s5 + $0x68] sm:$0xff]
    %v1217 = vld [vmem:[%s5 + $0x70] sm:$0xff]
    %v1218 = vld [vmem:[%s5 + $0x78] sm:$0xff]
    %v1219 = vld [vmem:[%s5 + $0x80] sm:$0xff]
    %v1220 = vld [vmem:[%s5 + $0x88] sm:$0xff]
    %v1221 = vld [vmem:[%s5 + $0x90] sm:$0xff]
    %v1222 = vld [vmem:[%s5 + $0x98] sm:$0xff]
    %v1223 = vld [vmem:[%s5 + $0xa0] sm:$0xff]
    %v1224 = vld [vmem:[%s5 + $0xa8] sm:$0xff]
    %v1225 = vld [vmem:[%s5 + $0xb0] sm:$0xff]
    %v1226 = vld [vmem:[%s5 + $0xb8] sm:$0xff]
    %v1227 = vld [vmem:[%s5 + $0xc0] sm:$0xff]
    %v1228 = vld [vmem:[%s5 + $0xc8] sm:$0xff]
    %v1229 = vld [vmem:[%s5 + $0xd0] sm:$0xff]
    %v1230 = vld [vmem:[%s5 + $0xd8] sm:$0xff]
    %v1231 = vld [vmem:[%s5 + $0xe0] sm:$0xff]
    %v1232 = vld [vmem:[%s5 + $0xe8] sm:$0xff]
    %v1233 = vld [vmem:[%s5 + $0xf0] sm:$0xff]
    %v1234 = vld [vmem:[%s5 + $0xf8] sm:$0xff]
    %v1235 = vunpack.c.l.bf16 %v1187
    %v1236 = vunpack.c.h.bf16 %v1187
    %v1237 = vunpack.c.l.bf16 %v1188
    %v1238 = vunpack.c.h.bf16 %v1188
    %v1239 = vunpack.c.l.bf16 %v1189
    %v1240 = vunpack.c.h.bf16 %v1189
    %v1241 = vunpack.c.l.bf16 %v1190
    %v1242 = vunpack.c.h.bf16 %v1190
    %v1243 = vunpack.c.l.bf16 %v1191
    %v1244 = vunpack.c.h.bf16 %v1191
    %v1245 = vunpack.c.l.bf16 %v1192
    %v1246 = vunpack.c.h.bf16 %v1192
    %v1247 = vunpack.c.l.bf16 %v1193
    %v1248 = vunpack.c.h.bf16 %v1193
    %v1249 = vunpack.c.l.bf16 %v1194
    %v1250 = vunpack.c.h.bf16 %v1194
    %v1251 = vunpack.c.l.bf16 %v1195
    %v1252 = vunpack.c.h.bf16 %v1195
    %v1253 = vunpack.c.l.bf16 %v1196
    %v1254 = vunpack.c.h.bf16 %v1196
    %v1255 = vunpack.c.l.bf16 %v1197
    %v1256 = vunpack.c.h.bf16 %v1197
    %v1257 = vunpack.c.l.bf16 %v1198
    %v1258 = vunpack.c.h.bf16 %v1198
    %v1259 = vunpack.c.l.bf16 %v1199
    %v1260 = vunpack.c.h.bf16 %v1199
    %v1261 = vunpack.c.l.bf16 %v1200
    %v1262 = vunpack.c.h.bf16 %v1200
    %v1263 = vunpack.c.l.bf16 %v1201
    %v1264 = vunpack.c.h.bf16 %v1201
    %v1265 = vunpack.c.l.bf16 %v1202
    %v1266 = vunpack.c.h.bf16 %v1202
    %1268 = vset.pattern.permute.xlu0 0
    %1269 = vperm.xlu0 %1268, %v1203
    %v1270 = vpop.permute.xlu0 %1269
    %1273 = vset.pattern.permute.xlu0 0
    %1274 = vperm.xlu0 %1273, %v1204
    %v1275 = vpop.permute.xlu0 %1274
    %1278 = vset.pattern.permute.xlu0 0
    %1279 = vperm.xlu0 %1278, %v1205
    %v1280 = vpop.permute.xlu0 %1279
    %1283 = vset.pattern.permute.xlu0 0
    %1284 = vperm.xlu0 %1283, %v1206
    %v1285 = vpop.permute.xlu0 %1284
    %1288 = vset.pattern.permute.xlu0 0
    %1289 = vperm.xlu0 %1288, %v1207
    %v1290 = vpop.permute.xlu0 %1289
    %1293 = vset.pattern.permute.xlu0 0
    %1294 = vperm.xlu0 %1293, %v1208
    %v1295 = vpop.permute.xlu0 %1294
    %1298 = vset.pattern.permute.xlu0 0
    %1299 = vperm.xlu0 %1298, %v1209
    %v1300 = vpop.permute.xlu0 %1299
    %1303 = vset.pattern.permute.xlu0 0
    %1304 = vperm.xlu0 %1303, %v1210
    %v1305 = vpop.permute.xlu0 %1304
    %1308 = vset.pattern.permute.xlu0 0
    %1309 = vperm.xlu0 %1308, %v1211
    %v1310 = vpop.permute.xlu0 %1309
    %1313 = vset.pattern.permute.xlu0 0
    %1314 = vperm.xlu0 %1313, %v1212
    %v1315 = vpop.permute.xlu0 %1314
    %1318 = vset.pattern.permute.xlu0 0
    %1319 = vperm.xlu0 %1318, %v1213
    %v1320 = vpop.permute.xlu0 %1319
    %1323 = vset.pattern.permute.xlu0 0
    %1324 = vperm.xlu0 %1323, %v1214
    %v1325 = vpop.permute.xlu0 %1324
    %1328 = vset.pattern.permute.xlu0 0
    %1329 = vperm.xlu0 %1328, %v1215
    %v1330 = vpop.permute.xlu0 %1329
    %1333 = vset.pattern.permute.xlu0 0
    %1334 = vperm.xlu0 %1333, %v1216
    %v1335 = vpop.permute.xlu0 %1334
    %1338 = vset.pattern.permute.xlu0 0
    %1339 = vperm.xlu0 %1338, %v1217
    %v1340 = vpop.permute.xlu0 %1339
    %1343 = vset.pattern.permute.xlu0 0
    %1344 = vperm.xlu0 %1343, %v1218
    %v1345 = vpop.permute.xlu0 %1344
    %1348 = vset.pattern.permute.xlu0 0
    %1349 = vperm.xlu0 %1348, %v1219
    %v1350 = vpop.permute.xlu0 %1349
    %1353 = vset.pattern.permute.xlu0 0
    %1354 = vperm.xlu0 %1353, %v1220
    %v1355 = vpop.permute.xlu0 %1354
    %1358 = vset.pattern.permute.xlu0 0
    %1359 = vperm.xlu0 %1358, %v1221
    %v1360 = vpop.permute.xlu0 %1359
    %1363 = vset.pattern.permute.xlu0 0
    %1364 = vperm.xlu0 %1363, %v1222
    %v1365 = vpop.permute.xlu0 %1364
    %1368 = vset.pattern.permute.xlu0 0
    %1369 = vperm.xlu0 %1368, %v1223
    %v1370 = vpop.permute.xlu0 %1369
    %1373 = vset.pattern.permute.xlu0 0
    %1374 = vperm.xlu0 %1373, %v1224
    %v1375 = vpop.permute.xlu0 %1374
    %1378 = vset.pattern.permute.xlu0 0
    %1379 = vperm.xlu0 %1378, %v1225
    %v1380 = vpop.permute.xlu0 %1379
    %1383 = vset.pattern.permute.xlu0 0
    %1384 = vperm.xlu0 %1383, %v1226
    %v1385 = vpop.permute.xlu0 %1384
    %1388 = vset.pattern.permute.xlu0 0
    %1389 = vperm.xlu0 %1388, %v1227
    %v1390 = vpop.permute.xlu0 %1389
    %1393 = vset.pattern.permute.xlu0 0
    %1394 = vperm.xlu0 %1393, %v1228
    %v1395 = vpop.permute.xlu0 %1394
    %1398 = vset.pattern.permute.xlu0 0
    %1399 = vperm.xlu0 %1398, %v1229
    %v1400 = vpop.permute.xlu0 %1399
    %1403 = vset.pattern.permute.xlu0 0
    %1404 = vperm.xlu0 %1403, %v1230
    %v1405 = vpop.permute.xlu0 %1404
    %1408 = vset.pattern.permute.xlu0 0
    %1409 = vperm.xlu0 %1408, %v1231
    %v1410 = vpop.permute.xlu0 %1409
    %1413 = vset.pattern.permute.xlu0 0
    %1414 = vperm.xlu0 %1413, %v1232
    %v1415 = vpop.permute.xlu0 %1414
    %1418 = vset.pattern.permute.xlu0 0
    %1419 = vperm.xlu0 %1418, %v1233
    %v1420 = vpop.permute.xlu0 %1419
    %1423 = vset.pattern.permute.xlu0 0
    %1424 = vperm.xlu0 %1423, %v1234
    %v1425 = vpop.permute.xlu0 %1424
    %v1427 = vmul.f32 %v1235, %v1270
    %v1428 = vmul.f32 %v1236, %v1275
    %v1429 = vmul.f32 %v1237, %v1280
    %v1430 = vmul.f32 %v1238, %v1285
    %v1431 = vmul.f32 %v1239, %v1290
    %v1432 = vmul.f32 %v1240, %v1295
    %v1433 = vmul.f32 %v1241, %v1300
    %v1434 = vmul.f32 %v1242, %v1305
    %v1435 = vmul.f32 %v1243, %v1310
    %v1436 = vmul.f32 %v1244, %v1315
    %v1437 = vmul.f32 %v1245, %v1320
    %v1438 = vmul.f32 %v1246, %v1325
    %v1439 = vmul.f32 %v1247, %v1330
    %v1440 = vmul.f32 %v1248, %v1335
    %v1441 = vmul.f32 %v1249, %v1340
    %v1442 = vmul.f32 %v1250, %v1345
    %v1443 = vmul.f32 %v1251, %v1350
    %v1444 = vmul.f32 %v1252, %v1355
    %v1445 = vmul.f32 %v1253, %v1360
    %v1446 = vmul.f32 %v1254, %v1365
    %v1447 = vmul.f32 %v1255, %v1370
    %v1448 = vmul.f32 %v1256, %v1375
    %v1449 = vmul.f32 %v1257, %v1380
    %v1450 = vmul.f32 %v1258, %v1385
    %v1451 = vmul.f32 %v1259, %v1390
    %v1452 = vmul.f32 %v1260, %v1395
    %v1453 = vmul.f32 %v1261, %v1400
    %v1454 = vmul.f32 %v1262, %v1405
    %v1455 = vmul.f32 %v1263, %v1410
    %v1456 = vmul.f32 %v1264, %v1415
    %v1457 = vmul.f32 %v1265, %v1420
    %v1458 = vmul.f32 %v1266, %v1425
    %vm1459 = vcmask 64512
    %v1460 = vsel %vm1459, %v1427, 0.0
    %v1461 = vsel %vm1459, %v1428, 0.0
    %v1462 = vadd.f32 %v1460, %v1461
    %v1463 = vsel %vm1459, %v1429, 0.0
    %v1464 = vadd.f32 %v1462, %v1463
    %v1465 = vsel %vm1459, %v1430, 0.0
    %v1466 = vadd.f32 %v1464, %v1465
    %v1467 = vsel %vm1459, %v1431, 0.0
    %v1468 = vadd.f32 %v1466, %v1467
    %v1469 = vsel %vm1459, %v1432, 0.0
    %v1470 = vadd.f32 %v1468, %v1469
    %v1471 = vsel %vm1459, %v1433, 0.0
    %v1472 = vadd.f32 %v1470, %v1471
    %v1473 = vsel %vm1459, %v1434, 0.0
    %v1474 = vadd.f32 %v1472, %v1473
    %v1475 = vsel %vm1459, %v1435, 0.0
    %v1476 = vadd.f32 %v1474, %v1475
    %v1477 = vsel %vm1459, %v1436, 0.0
    %v1478 = vadd.f32 %v1476, %v1477
    %v1479 = vsel %vm1459, %v1437, 0.0
    %v1480 = vadd.f32 %v1478, %v1479
    %v1481 = vsel %vm1459, %v1438, 0.0
    %v1482 = vadd.f32 %v1480, %v1481
    %v1483 = vsel %vm1459, %v1439, 0.0
    %v1484 = vadd.f32 %v1482, %v1483
    %v1485 = vsel %vm1459, %v1440, 0.0
    %v1486 = vadd.f32 %v1484, %v1485
    %v1487 = vsel %vm1459, %v1441, 0.0
    %v1488 = vadd.f32 %v1486, %v1487
    %v1489 = vsel %vm1459, %v1442, 0.0
    %v1490 = vadd.f32 %v1488, %v1489
    %v1491 = vsel %vm1459, %v1443, 0.0
    %v1492 = vadd.f32 %v1490, %v1491
    %v1493 = vsel %vm1459, %v1444, 0.0
    %v1494 = vadd.f32 %v1492, %v1493
    %v1495 = vsel %vm1459, %v1445, 0.0
    %v1496 = vadd.f32 %v1494, %v1495
    %v1497 = vsel %vm1459, %v1446, 0.0
    %v1498 = vadd.f32 %v1496, %v1497
    %v1499 = vsel %vm1459, %v1447, 0.0
    %v1500 = vadd.f32 %v1498, %v1499
    %v1501 = vsel %vm1459, %v1448, 0.0
    %v1502 = vadd.f32 %v1500, %v1501
    %v1503 = vsel %vm1459, %v1449, 0.0
    %v1504 = vadd.f32 %v1502, %v1503
    %v1505 = vsel %vm1459, %v1450, 0.0
    %v1506 = vadd.f32 %v1504, %v1505
    %v1507 = vsel %vm1459, %v1451, 0.0
    %v1508 = vadd.f32 %v1506, %v1507
    %v1509 = vsel %vm1459, %v1452, 0.0
    %v1510 = vadd.f32 %v1508, %v1509
    %v1511 = vsel %vm1459, %v1453, 0.0
    %v1512 = vadd.f32 %v1510, %v1511
    %v1513 = vsel %vm1459, %v1454, 0.0
    %v1514 = vadd.f32 %v1512, %v1513
    %v1515 = vsel %vm1459, %v1455, 0.0
    %v1516 = vadd.f32 %v1514, %v1515
    %v1517 = vsel %vm1459, %v1456, 0.0
    %v1518 = vadd.f32 %v1516, %v1517
    %v1519 = vsel %vm1459, %v1457, 0.0
    %v1520 = vadd.f32 %v1518, %v1519
    %v1521 = vsel %vm1459, %v1458, 0.0
    %v1522 = vadd.f32 %v1520, %v1521
    %v1523 = vrot.slane %v1522, 4
    %v1524 = vadd.f32 %v1522, %v1523
    %v1525 = vrot.slane %v1524, 2
    %v1526 = vadd.f32 %v1524, %v1525
    %v1527 = vrot.slane %v1526, 1
    %v1528 = vadd.f32 %v1526, %v1527
    %s1529 = sld [smem:[#allocation2]]
    %v1530 = vstv %s1529
    %v1531 = vadd.f32 %v1528, %v1530
    %vm1532 = vcmask 57344
    %1533 = vst.msk [vmem:[#allocation3] sm:$0x1] %vm1532, %v1531
    // Predicated region
    $region30: #{tpu_custom_call.1} parent=1 // pred_check
      _
    $region31: #{tpu_custom_call.1} parent=1 // pred_check_branch
      %1535 = sbr.rel (0) target = $region33
    $region32: #{tpu_custom_call.1} parent=1 // pred_region
      %s1537 = ssub.s32 16, 16
      %1538 = vsyncadd [#allocation4], %s1537
      %s1540 = sshll.u32 [#allocation3], 4
      %s1541 = int_to_ptr.vmem [resolvable:$true] %s1540
      %1543 = dma.vmem_to_hbm [thread:$0]  %s1541, 16, %s7, [#allocation4]
    $region33: #{tpu_custom_call.1} parent=1 // pred_fallthru
      _
    // Predicated region
    $region34: #{tpu_custom_call.1} parent=1 // pred_check
      _
    $region35: #{tpu_custom_call.1} parent=1 // pred_check_branch
      %1545 = sbr.rel (0) target = $region37
    $region36: #{tpu_custom_call.1} parent=1 // pred_region
      %1546 = dma.done [#allocation4], 16
    $region37: #{tpu_custom_call.1} parent=1 // pred_fallthru
      _
    %1547 = vsyncpa [#allocation4], 1

</llo_original>
